<compile_context>
chip_gen: v7x
topology: tpu7x:2x2x1
jax: 0.10.0
libtpu: 0.0.40
codegen_flags: <defaults>
</compile_context>

<pallas_src>
import functools
import math

import jax
import jax.numpy as jnp
from jax.experimental import pallas as pl
from jax.experimental.pallas import tpu as pltpu


def _round_up(n, m):
    return ((n + m - 1) // m) * m


def _vmem_budget_bytes():
    """Per-core VMEM budget with headroom, derived from the actual chip."""
    try:
        cap = int(pltpu.get_tpu_info().vmem_capacity_bytes)
    except Exception:
        cap = 64 * 1024 * 1024  # conservative fallback (v7x per-TC capacity)
    return max(16 * 1024 * 1024, min((cap * 3) // 5, 96 * 1024 * 1024))


# --------------------------------------------------------------------------
# Standalone LayerNorm kernel (context path / generic fn path)
# --------------------------------------------------------------------------
def _layernorm_kernel(x_ref, g_ref, b_ref, o_ref, *, eps):
    x = x_ref[...].astype(jnp.float32)
    mean = jnp.mean(x, axis=-1, keepdims=True)
    xc = x - mean
    var = jnp.mean(xc * xc, axis=-1, keepdims=True)
    inv = jax.lax.rsqrt(var + eps)
    y = xc * inv * g_ref[...].astype(jnp.float32) + b_ref[...].astype(jnp.float32)
    o_ref[...] = y.astype(o_ref.dtype)


def layernorm_pallas(x, gamma, beta, *, eps=1e-5, block_rows=None):
    """LayerNorm over the last dim of x (any leading shape). gamma/beta: (D,)."""
    orig_shape = x.shape
    d = orig_shape[-1]
    m = math.prod(orig_shape[:-1]) if len(orig_shape) > 1 else 1
    x2 = x.reshape(m, d)
    g2 = gamma.reshape(1, d)
    b2 = beta.reshape(1, d)

    budget = _vmem_budget_bytes()
    if block_rows is None:
        # LN is HBM-roofline-bound: move >= ~2 MiB per grid step, cap by VMEM
        # (x + out tiles, double-buffered).
        bytes_per_row = d * max(x.dtype.itemsize, 4)
        target = max(8, (2 * 1024 * 1024) // bytes_per_row)
        vmem_cap = max(8, budget // (16 * d))
        block_rows = min(4096, _round_up(min(target, vmem_cap), 8))
    # Keep >= 2 grid steps so both v7x TensorCores get work (harmless on 1-TC chips).
    tm = min(block_rows, max(8, _round_up(pl.cdiv(m, 2), 8)))
    grid = (int(pl.cdiv(m, tm)),)

    out = pl.pallas_call(
        functools.partial(_layernorm_kernel, eps=eps),
        out_shape=jax.ShapeDtypeStruct((m, d), x.dtype),
        grid=grid,
        in_specs=[
            pl.BlockSpec((tm, d), lambda i: (i, 0)),   # x rows: streamed
            pl.BlockSpec((1, d), lambda i: (0, 0)),    # gamma: resident
            pl.BlockSpec((1, d), lambda i: (0, 0)),    # beta:  resident
        ],
        out_specs=pl.BlockSpec((tm, d), lambda i: (i, 0)),
        compiler_params=pltpu.CompilerParams(
            dimension_semantics=("parallel",),
            vmem_limit_bytes=int(budget),
        ),
    )(x2, g2, b2)
    return out.reshape(orig_shape)


# --------------------------------------------------------------------------
# Fused PreNorm + GEGLU FeedForward kernels
# --------------------------------------------------------------------------
def _prenorm_ffn_resident_kernel(x_ref, g_ref, b_ref, w1a_ref, w1g_ref,
                                 b1a_ref, b1g_ref, w2_ref, b2_ref, o_ref, *, eps):
    """Weights fully VMEM-resident; no hidden-dim grid, no accumulator scratch."""
    # Fused LayerNorm on the (tm, d) row tile, in f32.
    x = x_ref[...].astype(jnp.float32)
    mean = jnp.mean(x, axis=-1, keepdims=True)
    xc = x - mean
    var = jnp.mean(xc * xc, axis=-1, keepdims=True)
    xn = xc * jax.lax.rsqrt(var + eps) * g_ref[...].astype(jnp.float32) \
        + b_ref[...].astype(jnp.float32)
    xn = xn.astype(w1a_ref.dtype)  # bf16 MXU operand

    h_a = jnp.dot(xn, w1a_ref[...], preferred_element_type=jnp.float32)
    h_a = h_a + b1a_ref[...].astype(jnp.float32)
    h_g = jnp.dot(xn, w1g_ref[...], preferred_element_type=jnp.float32)
    h_g = h_g + b1g_ref[...].astype(jnp.float32)

    # Exact (erf) GELU on the gate in f32, matching torch.nn.functional.gelu.
    gelu_g = 0.5 * h_g * (1.0 + jax.lax.erf(h_g * (1.0 / math.sqrt(2.0))))
    z = (h_a * gelu_g).astype(w2_ref.dtype)

    y = jnp.dot(z, w2_ref[...], preferred_element_type=jnp.float32)
    o_ref[...] = (y + b2_ref[...].astype(jnp.float32)).astype(o_ref.dtype)


def _prenorm_ffn_tiled_kernel(x_ref, g_ref, b_ref, w1a_ref, w1g_ref,
                              b1a_ref, b1g_ref, w2_ref, b2_ref, o_ref,
                              xn_ref, acc_ref, *, eps):
    """Hidden dim tiled (reduction axis last in grid); f32 accumulator."""
    k = pl.program_id(1)

    @pl.when(k == 0)
    def _():
        x = x_ref[...].astype(jnp.float32)
        mean = jnp.mean(x, axis=-1, keepdims=True)
        xc = x - mean
        var = jnp.mean(xc * xc, axis=-1, keepdims=True)
        xn = xc * jax.lax.rsqrt(var + eps) * g_ref[...].astype(jnp.float32) \
            + b_ref[...].astype(jnp.float32)
        xn_ref[...] = xn
        acc_ref[...] = jnp.zeros_like(acc_ref)

    xn = xn_ref[...].astype(w1a_ref.dtype)  # bf16 MXU operand
    h_a = jnp.dot(xn, w1a_ref[...], preferred_element_type=jnp.float32)
    h_a = h_a + b1a_ref[...].astype(jnp.float32)
    h_g = jnp.dot(xn, w1g_ref[...], preferred_element_type=jnp.float32)
    h_g = h_g + b1g_ref[...].astype(jnp.float32)

    gelu_g = 0.5 * h_g * (1.0 + jax.lax.erf(h_g * (1.0 / math.sqrt(2.0))))
    z = (h_a * gelu_g).astype(w2_ref.dtype)
    acc_ref[...] += jnp.dot(z, w2_ref[...], preferred_element_type=jnp.float32)

    @pl.when(k == pl.num_programs(1) - 1)
    def _():
        o_ref[...] = (acc_ref[...] + b2_ref[...].astype(jnp.float32)).astype(o_ref.dtype)


def _pick_hidden_tile(hidden, block_hidden):
    if hidden <= block_hidden:
        return hidden
    th = (block_hidden // 128) * 128
    while th >= 128:
        if hidden % th == 0:
            return th
        th -= 128
    # TODO(synk): mask ragged hidden tiles instead of loading the full hidden dim.
    return hidden


def prenorm_feed_forward_pallas(x, gamma, beta, packed, *, eps=1e-5,
                                block_rows=256, block_hidden=512,
                                force_tiled=False):
    """Fused LayerNorm(dim) -> Linear(d,2H) -> GEGLU -> Linear(H,d).

    `packed` = (w1a, w1g, b1a, b1g, w2, b2) with pre-split GEGLU halves and
    matmul weights already in the MXU dtype (bf16) — see pack_feed_forward_params.
    """
    w1a, w1g, b1a, b1g, w2, b2 = packed
    orig_shape = x.shape
    d = orig_shape[-1]
    hidden = w2.shape[0]
    assert w1a.shape == (d, hidden) and w1g.shape == (d, hidden) and w2.shape == (hidden, d)

    m = math.prod(orig_shape[:-1]) if len(orig_shape) > 1 else 1
    x2 = x.reshape(m, d)
    g2 = gamma.reshape(1, d)
    bt2 = beta.reshape(1, d)

    budget = _vmem_budget_bytes()
    w_isz = w1a.dtype.itemsize
    x_isz = x.dtype.itemsize
    # Keep >= 2 M-grid steps (v7x has 2 TCs); rows (8,128)-aligned.
    tm = min(block_rows, max(8, _round_up(pl.cdiv(m, 2), 8)))

    def resident_bytes(tm_):
        weights = 2 * (3 * d * hidden * w_isz + (2 * hidden + d) * 4)   # possibly double-buffered
        io = 2 * 2 * tm_ * d * x_isz                                    # x + out, double-buffered
        inter = tm_ * (4 * hidden + 4 * d) * 4                          # f32 intermediates / spill
        return weights + io + inter

    use_resident = (not force_tiled) and resident_bytes(8) <= budget

    if use_resident:
        while tm > 8 and resident_bytes(tm) > budget:
            tm = max(8, _round_up(tm // 2, 8))
        grid = (int(pl.cdiv(m, tm)),)
        out = pl.pallas_call(
            functools.partial(_prenorm_ffn_resident_kernel, eps=eps),
            out_shape=jax.ShapeDtypeStruct((m, d), x.dtype),
            grid=grid,
            in_specs=[
                pl.BlockSpec((tm, d), lambda i: (i, 0)),        # x rows: streamed
                pl.BlockSpec((1, d), lambda i: (0, 0)),         # gamma
                pl.BlockSpec((1, d), lambda i: (0, 0)),         # beta
                pl.BlockSpec((d, hidden), lambda i: (0, 0)),    # W1 value half (resident)
                pl.BlockSpec((d, hidden), lambda i: (0, 0)),    # W1 gate half  (resident)
                pl.BlockSpec((1, hidden), lambda i: (0, 0)),    # b1 value half
                pl.BlockSpec((1, hidden), lambda i: (0, 0)),    # b1 gate half
                pl.BlockSpec((hidden, d), lambda i: (0, 0)),    # W2 (resident)
                pl.BlockSpec((1, d), lambda i: (0, 0)),         # b2
            ],
            out_specs=pl.BlockSpec((tm, d), lambda i: (i, 0)),
            compiler_params=pltpu.CompilerParams(
                dimension_semantics=("parallel",),
                vmem_limit_bytes=int(budget),
            ),
        )(x2, g2, bt2, w1a, w1g, b1a, b1g, w2, b2)
        return out.reshape(orig_shape)

    # Hidden-tiled fallback (large hidden): reduction axis last in the grid.
    th = _pick_hidden_tile(hidden, block_hidden)

    def tiled_bytes(tm_):
        weights = 2 * (3 * d * th * w_isz + 2 * th * 4) + 2 * d * 4
        io = 2 * 2 * tm_ * d * x_isz
        scratch = 2 * tm_ * d * 4                 # xn (f32) + acc (f32)
        inter = tm_ * (4 * th + 2 * d) * 4
        return weights + io + scratch + inter

    while tm > 8 and tiled_bytes(tm) > budget:
        tm = max(8, _round_up(tm // 2, 8))

    grid = (int(pl.cdiv(m, tm)), hidden // th)
    out = pl.pallas_call(
        functools.partial(_prenorm_ffn_tiled_kernel, eps=eps),
        out_shape=jax.ShapeDtypeStruct((m, d), x.dtype),
        grid=grid,
        in_specs=[
            pl.BlockSpec((tm, d), lambda i, k: (i, 0)),    # x rows (resident across k)
            pl.BlockSpec((1, d), lambda i, k: (0, 0)),     # gamma
            pl.BlockSpec((1, d), lambda i, k: (0, 0)),     # beta
            pl.BlockSpec((d, th), lambda i, k: (0, k)),    # W1 value half tile
            pl.BlockSpec((d, th), lambda i, k: (0, k)),    # W1 gate half tile
            pl.BlockSpec((1, th), lambda i, k: (0, k)),    # b1 value half tile
            pl.BlockSpec((1, th), lambda i, k: (0, k)),    # b1 gate half tile
            pl.BlockSpec((th, d), lambda i, k: (k, 0)),    # W2 tile
            pl.BlockSpec((1, d), lambda i, k: (0, 0)),     # b2
        ],
        out_specs=pl.BlockSpec((tm, d), lambda i, k: (i, 0)),
        scratch_shapes=[
            pltpu.VMEM((tm, d), jnp.float32),   # normalized x (reused across k)
            pltpu.VMEM((tm, d), jnp.float32),   # f32 accumulator
        ],
        compiler_params=pltpu.CompilerParams(
            dimension_semantics=("parallel", "arbitrary"),
            vmem_limit_bytes=int(budget),
        ),
    )(x2, g2, bt2, w1a, w1g, b1a, b1g, w2, b2)
    return out.reshape(orig_shape)


# --------------------------------------------------------------------------
# Parameter init / packing (weight preprocessing hoisted out of the forward)
# --------------------------------------------------------------------------
def pack_feed_forward_params(w1, b1, w2, b2, *, matmul_dtype=jnp.bfloat16):
    """Pre-split GEGLU halves + cast MXU operands once (not per forward call)."""
    hidden, d = w2.shape
    w1a = w1[:, :hidden].astype(matmul_dtype)
    w1g = w1[:, hidden:].astype(matmul_dtype)
    b1a = b1[:hidden].reshape(1, hidden).astype(jnp.float32)
    b1g = b1[hidden:].reshape(1, hidden).astype(jnp.float32)
    w2c = w2.astype(matmul_dtype)
    b2c = b2.reshape(1, d).astype(jnp.float32)
    return (w1a, w1g, b1a, b1g, w2c, b2c)


def init_feed_forward_params(key, dim, mult=4, param_dtype=jnp.float32,
                             matmul_dtype=jnp.bfloat16):
    """nn.Linear-like uniform init; weights stored as (in, out)."""
    hidden = dim * mult
    k1, k2, k3, k4 = jax.random.split(key, 4)
    bound1 = 1.0 / math.sqrt(dim)
    bound2 = 1.0 / math.sqrt(hidden)
    w1 = jax.random.uniform(k1, (dim, 2 * hidden), param_dtype, -bound1, bound1)
    b1 = jax.random.uniform(k2, (2 * hidden,), param_dtype, -bound1, bound1)
    w2 = jax.random.uniform(k3, (hidden, dim), param_dtype, -bound2, bound2)
    b2 = jax.random.uniform(k4, (dim,), param_dtype, -bound2, bound2)
    packed = pack_feed_forward_params(w1, b1, w2, b2, matmul_dtype=matmul_dtype)
    return (w1, b1, w2, b2), packed


# --------------------------------------------------------------------------
# PreNorm module
# --------------------------------------------------------------------------
class PreNorm:
    """y = fn(LayerNorm(x), **kwargs); optional LayerNorm on kwargs['context'].

    If fn exposes `fused_prenorm(x, gamma, beta, eps, **kwargs)`, the x-side
    LayerNorm is fused into fn's first kernel (no HBM round trip of normed x).
    """

    def __init__(self, dim, fn, context_dim=None, dtype=jnp.float32, eps=1e-5):
        self.fn = fn
        self.dim = dim
        self.context_dim = context_dim
        self.eps = eps
        self.gamma = jnp.ones((dim,), dtype)
        self.beta = jnp.zeros((dim,), dtype)
        if context_dim is not None:
            self.ctx_gamma = jnp.ones((context_dim,), dtype)
            self.ctx_beta = jnp.zeros((context_dim,), dtype)

    def __call__(self, x, **kwargs):
        if self.context_dim is not None and "context" in kwargs:
            # NOTE: the torch module's .to('cuda') device move has no JAX equivalent / is a no-op.
            kwargs = dict(kwargs, context=layernorm_pallas(
                kwargs["context"], self.ctx_gamma, self.ctx_beta, eps=self.eps))
        if hasattr(self.fn, "fused_prenorm"):
            return self.fn.fused_prenorm(x, self.gamma, self.beta, self.eps, **kwargs)
        x = layernorm_pallas(x, self.gamma, self.beta, eps=self.eps)
        return self.fn(x, **kwargs)


class DemoContextFFN:
    """Demo `fn`: GEGLU FFN on x plus a context-conditioned shift.  Supports fusion."""

    def __init__(self, packed_ffn_params, w_ctx):
        self.packed = packed_ffn_params
        self.w_ctx = w_ctx

    def fused_prenorm(self, x, gamma, beta, eps, *, context=None):
        y = prenorm_feed_forward_pallas(x, gamma, beta, self.packed, eps=eps)
        if context is not None:
            y = y + jnp.mean(context, axis=-2, keepdims=True) @ self.w_ctx
        return y


# --------------------------------------------------------------------------
# Demo / correctness check
# --------------------------------------------------------------------------
if __name__ == "__main__":
    key = jax.random.PRNGKey(0)
    k_x, k_ctx, k_ffn, k_g, k_b, k_cg, k_cb, k_wc, k_wp = jax.random.split(key, 9)

    batch, seq, dim, mult = 2, 7, 128, 4        # seq=7 -> ragged last row block (no pad path)
    ctx_seq, context_dim = 12, 128
    hidden = dim * mult

    x = jax.random.normal(k_x, (batch, seq, dim), jnp.float32)
    context = jax.random.normal(k_ctx, (batch, ctx_seq, context_dim), jnp.float32)

    (w1, b1, w2, b2), packed = init_feed_forward_params(k_ffn, dim, mult)
    w_ctx = 0.02 * jax.random.normal(k_wc, (context_dim, dim), jnp.float32)

    fn = DemoContextFFN(packed, w_ctx)
    prenorm = PreNorm(dim, fn, context_dim=context_dim)
    # Non-trivial affine params so the LayerNorm scale/shift are exercised.
    prenorm.gamma = 1.0 + 0.1 * jax.random.normal(k_g, (dim,), jnp.float32)
    prenorm.beta = 0.1 * jax.random.normal(k_b, (dim,), jnp.float32)
    prenorm.ctx_gamma = 1.0 + 0.1 * jax.random.normal(k_cg, (context_dim,), jnp.float32)
    prenorm.ctx_beta = 0.1 * jax.random.normal(k_cb, (context_dim,), jnp.float32)

    y = jax.block_until_ready(prenorm(x, context=context))
    assert y.shape == (batch, seq, dim)

    # ---- references -------------------------------------------------------
    def layernorm_ref(v, g, b, eps=1e-5):
        mean = jnp.mean(v, axis=-1, keepdims=True)
        var = jnp.mean((v - mean) ** 2, axis=-1, keepdims=True)
        return (v - mean) * jax.lax.rsqrt(var + eps) * g + b

    xn_ref = layernorm_ref(x, prenorm.gamma, prenorm.beta)
    cn_ref = layernorm_ref(context, prenorm.ctx_gamma, prenorm.ctx_beta)
    ctx_term = jnp.mean(cn_ref, axis=-2, keepdims=True) @ w_ctx

    # (a) tight check: reference using the same bf16 MXU operands as the kernel.
    def ffn_ref_mxu(v):
        w1a, w1g, b1a, b1g, w2c, b2c = packed
        v2 = v.reshape(-1, dim).astype(w1a.dtype)
        h_a = jnp.dot(v2, w1a, preferred_element_type=jnp.float32) + b1a
        h_g = jnp.dot(v2, w1g, preferred_element_type=jnp.float32) + b1g
        gg = 0.5 * h_g * (1.0 + jax.lax.erf(h_g * (1.0 / math.sqrt(2.0))))
        z = (h_a * gg).astype(w2c.dtype)
        out = jnp.dot(z, w2c, preferred_element_type=jnp.float32) + b2c
        return out.reshape(v.shape)

    y_ffn_tight = ffn_ref_mxu(xn_ref)
    y_tight = y_ffn_tight + ctx_term
    err_tight = float(jnp.max(jnp.abs(y - y_tight)))
    assert err_tight < 2e-3, f"kernel vs bf16-operand reference: {err_tight}"

    # (b) loose check: full-f32 torch semantics (bf16 MXU operands change numerics).
    def ffn_ref_f32(v):
        h = v @ w1 + b1
        a, g = h[..., :hidden], h[..., hidden:]
        return (a * jax.nn.gelu(g, approximate=False)) @ w2 + b2

    y_f32 = ffn_ref_f32(xn_ref) + ctx_term
    err_f32 = float(jnp.max(jnp.abs(y - y_f32)))
    assert err_f32 < 5e-2, f"kernel vs f32 reference (bf16 tolerance): {err_f32}"

    # ---- hidden-tiled fallback kernel path ---------------------------------
    y_tiled = jax.block_until_ready(prenorm_feed_forward_pallas(
        x, prenorm.gamma, prenorm.beta, packed, force_tiled=True, block_hidden=256))
    err_tiled = float(jnp.max(jnp.abs(y_tiled - y_ffn_tight)))
    assert err_tiled < 2e-3, f"tiled kernel vs reference: {err_tiled}"

    # ---- generic (un-fused) PreNorm path: plain-JAX fn ----------------------
    w_proj = 0.05 * jax.random.normal(k_wp, (dim, dim), jnp.float32)
    plain = PreNorm(dim, lambda v, **kw: v @ w_proj)
    plain.gamma = prenorm.gamma
    plain.beta = prenorm.beta
    y_plain = jax.block_until_ready(plain(x))
    err_plain = float(jnp.max(jnp.abs(y_plain - xn_ref @ w_proj)))
    assert err_plain < 1e-4, f"layernorm kernel vs reference: {err_plain}"

    print("KERNEL_OK")
</pallas_src>

<mosaic_0001>
module attributes {stable_mosaic.version = 11 : i64} {
  func.func @_layernorm_kernel(%arg0: i32, %arg1: memref<16x128xf32, #tpu.memory_space<vmem>>, %arg2: memref<1x128xf32, #tpu.memory_space<vmem>>, %arg3: memref<1x128xf32, #tpu.memory_space<vmem>>, %arg4: memref<16x128xf32, #tpu.memory_space<vmem>>) attributes {dimension_semantics = [#tpu.dimension_semantics<parallel>], iteration_bounds = array<i64: 2>, scalar_prefetch = 0 : i64, scratch_operands = 0 : i64, tpu.core_type = #tpu.core_type<tc>, window_params = [{transform_indices = @transform_0, window_bounds = array<i64: 16, 128>}, {pipeline_mode = #tpu.pipeline_mode<synchronous>, transform_indices = @transform_1, window_bounds = array<i64: 1, 128>}, {pipeline_mode = #tpu.pipeline_mode<synchronous>, transform_indices = @transform_2, window_bounds = array<i64: 1, 128>}, {transform_indices = @transform_3, window_bounds = array<i64: 16, 128>}]} {
    %c0 = arith.constant 0 : index
    %c0_0 = arith.constant 0 : index
    %0 = vector.load %arg1[%c0, %c0_0] : memref<16x128xf32, #tpu.memory_space<vmem>>, vector<16x128xf32>
    %cst = arith.constant dense<0.000000e+00> : vector<16xf32>
    %1 = vector.multi_reduction <add>, %0, %cst [1] : vector<16x128xf32> to vector<16xf32>
    %2 = vector.shape_cast %1 : vector<16xf32> to vector<16x1xf32>
    %cst_1 = arith.constant 1.280000e+02 : f32
    %3 = vector.broadcast %cst_1 : f32 to vector<16x1xf32>
    %4 = arith.divf %2, %3 : vector<16x1xf32>
    %5 = vector.broadcast %4 : vector<16x1xf32> to vector<16x128xf32>
    %6 = arith.subf %0, %5 : vector<16x128xf32>
    %7 = arith.mulf %6, %6 : vector<16x128xf32>
    %cst_2 = arith.constant dense<0.000000e+00> : vector<16xf32>
    %8 = vector.multi_reduction <add>, %7, %cst_2 [1] : vector<16x128xf32> to vector<16xf32>
    %9 = vector.shape_cast %8 : vector<16xf32> to vector<16x1xf32>
    %cst_3 = arith.constant 1.280000e+02 : f32
    %10 = vector.broadcast %cst_3 : f32 to vector<16x1xf32>
    %11 = arith.divf %9, %10 : vector<16x1xf32>
    %cst_4 = arith.constant 9.99999974E-6 : f32
    %12 = vector.broadcast %cst_4 : f32 to vector<16x1xf32>
    %13 = arith.addf %11, %12 : vector<16x1xf32>
    %14 = math.rsqrt %13 : vector<16x1xf32>
    %15 = vector.broadcast %14 : vector<16x1xf32> to vector<16x128xf32>
    %16 = arith.mulf %6, %15 : vector<16x128xf32>
    %c0_5 = arith.constant 0 : index
    %c0_6 = arith.constant 0 : index
    %17 = vector.load %arg2[%c0_5, %c0_6] : memref<1x128xf32, #tpu.memory_space<vmem>>, vector<1x128xf32>
    %18 = vector.broadcast %17 : vector<1x128xf32> to vector<16x128xf32>
    %19 = arith.mulf %16, %18 : vector<16x128xf32>
    %c0_7 = arith.constant 0 : index
    %c0_8 = arith.constant 0 : index
    %20 = vector.load %arg3[%c0_7, %c0_8] : memref<1x128xf32, #tpu.memory_space<vmem>>, vector<1x128xf32>
    %21 = vector.broadcast %20 : vector<1x128xf32> to vector<16x128xf32>
    %22 = arith.addf %19, %21 : vector<16x128xf32>
    %c0_9 = arith.constant 0 : index
    %c0_10 = arith.constant 0 : index
    %23 = vector.load %arg4[%c0_9, %c0_10] : memref<16x128xf32, #tpu.memory_space<vmem>>, vector<16x128xf32>
    tpu.vector_store %arg4[%c0_9, %c0_10], %22 {strides = array<i32>} : memref<16x128xf32, #tpu.memory_space<vmem>>, vector<16x128xf32>,
    return
  }
  func.func @transform_0(%arg0: i32) -> (i32, i32) {
    %c0_i32 = arith.constant 0 : i32
    %c0_i32_0 = arith.constant 0 : i32
    return %arg0, %c0_i32 : i32, i32
  }
  func.func @transform_1(%arg0: i32) -> (i32, i32) {
    %c0_i32 = arith.constant 0 : i32
    %c0_i32_0 = arith.constant 0 : i32
    %c0_i32_1 = arith.constant 0 : i32
    return %c0_i32, %c0_i32_0 : i32, i32
  }
  func.func @transform_2(%arg0: i32) -> (i32, i32) {
    %c0_i32 = arith.constant 0 : i32
    %c0_i32_0 = arith.constant 0 : i32
    %c0_i32_1 = arith.constant 0 : i32
    return %c0_i32, %c0_i32_0 : i32, i32
  }
  func.func @transform_3(%arg0: i32) -> (i32, i32) {
    %c0_i32 = arith.constant 0 : i32
    %c0_i32_0 = arith.constant 0 : i32
    return %arg0, %c0_i32 : i32, i32
  }
}

</mosaic_0001>

<llo_original>
// kernel: tpu_custom_call.1
$region0: #{tpu_custom_call.1}
  #allocation0 [shape = 'u32[]', space=smem, size = 0x4, offset = 0x4, fixed_abs, tag = 'smem constant byte address 0x4 - core index']
  #allocation1 [shape = 'u32[144,128]{1,0:T(1,128)}', space=vmem, size = 0x12000, scoped, tag = 'internal scratch']
  %s0 = inlined_call_operand.hbm [shape: f32[24,128], index: 0, kind: input, shape index: {}]
  %s1 = inlined_call_operand.vmem [shape: f32[1,128], index: 1, kind: input, shape index: {}]
  %s2 = inlined_call_operand.vmem [shape: f32[1,128], index: 2, kind: input, shape index: {}]
  %s3 = inlined_call_operand.hbm [shape: f32[24,128], index: 3, kind: output, shape index: {}]
  %s4 = sld [smem:[#allocation0]]
  $region49: #{tpu_custom_call.1} parent=0
    _
  %s6 = ssub.s32 1, %s4
  %s7 = scalar_select 0, %s6, %s4
  $region1: #{tpu_custom_call.1} parent=0
    #allocation2 [shape = 'u8[16384]{0}', space=vmem, size = 0x4000, scoped, tag = 'input window, operand 0']
    #allocation3 [shape = 's32[2]{0}', space=sflag, size = 0x8, scoped, tag = 'scoped memory for tpu_custom_call.1']
    #allocation4 [shape = 's32[2]{0}', space=sflag, size = 0x8, scoped, tag = 'scoped memory for tpu_custom_call.1']
    #allocation5 [shape = 'u8[16384]{0}', space=vmem, size = 0x4000, scoped, tag = 'output window, operand 0']
    %8 = vsyncpa [#allocation3], 0
    %s9 = scalar_lea.sflag [#allocation3], 1
    %10 = vsyncpa %s9, 0
    %11 = vsyncpa [#allocation4], 0
    %s12 = scalar_lea.sflag [#allocation4], 1
    %13 = vsyncpa %s12, 0
    loop: start=0, step=1, limit=4
    $region2: #{tpu_custom_call.1} parent=1 // loop_pre_header
      _
    $region3: #{tpu_custom_call.1} parent=1 // loop_header
      %s15 = sphi 0, %s19
      %p16 = scmp.ge.s32.totalorder %s15, 4
      %s25 = sphi 0, %s27
      %s28 = sphi 0, %s25
      %s29 = sphi 0, %s28
      %s45 = sphi 0, %s29
      %s49 = sphi 0, %s49
      %s51 = sphi 0, %s49
      %s52 = sphi 0, %s51
      %s66 = sphi 0, %s52
      %s70 = sphi 0, %s70
      %s72 = sphi 0, %s70
      %s73 = sphi 0, %s72
      %s87 = sphi 0, %s73
      %s93 = sphi 0, %s95
      %s96 = sphi 0, %s93
      %s97 = sphi 0, %s96
      %s113 = sphi 0, %s97
    $region4: #{tpu_custom_call.1} parent=1 // loop_header_branch
      %18 = sbr.rel (%p16) target = $region8
    $region5: #{tpu_custom_call.1} parent=1 // loop_body
      %s20 = ssub.s32 %s15, 1
      %s21 = ssub.s32 %s15, 2
      %s22 = sadd.s32 %s15, 1
      %s23 = ssub.s32 %s15, %s22
      %p24 = scmp.eq.s32.totalorder %s23, 0
      %s26 = sadd.s32 %s25, 1
      %s27 = scalar_select %p24, %s25, %s26
      %p30 = pneg %p24
      %p31 = scmp.eq.s32.totalorder %s15, 1
      %p32 = por %p30, %p31
      %p33 = scmp.ne.s32.totalorder %s25, %s28
      %p34 = scmp.eq.s32.totalorder %s15, 0
      %p35 = por %p33, %p34
      %p36 = scmp.ne.s32.totalorder %s25, %s28
      %p37 = scmp.eq.s32.totalorder %s20, 1
      %p38 = por %p36, %p37
      %p39 = scmp.ne.s32.totalorder %s28, %s29
      %p40 = scmp.eq.s32.totalorder %s20, 0
      %p41 = por %p39, %p40
      %p42 = scmp.ne.s32.totalorder %s28, %s29
      %p43 = scmp.eq.s32.totalorder %s21, 1
      %p44 = por %p42, %p43
      %p46 = scmp.ne.s32.totalorder %s29, %s45
      %p47 = scmp.eq.s32.totalorder %s21, 0
      %p48 = por %p46, %p47
      %s50 = sadd.s32 %s49, 1
      %p53 = scmp.eq.s32.totalorder %s15, 1
      %p54 = scmp.ne.s32.totalorder %s49, %s51
      %p55 = scmp.eq.s32.totalorder %s15, 0
      %p56 = por %p54, %p55
      %p57 = scmp.ne.s32.totalorder %s49, %s51
      %p58 = scmp.eq.s32.totalorder %s20, 1
      %p59 = por %p57, %p58
      %p60 = scmp.ne.s32.totalorder %s51, %s52
      %p61 = scmp.eq.s32.totalorder %s20, 0
      %p62 = por %p60, %p61
      %p63 = scmp.ne.s32.totalorder %s51, %s52
      %p64 = scmp.eq.s32.totalorder %s21, 1
      %p65 = por %p63, %p64
      %p67 = scmp.ne.s32.totalorder %s52, %s66
      %p68 = scmp.eq.s32.totalorder %s21, 0
      %p69 = por %p67, %p68
      %s71 = sadd.s32 %s70, 1
      %p74 = scmp.eq.s32.totalorder %s15, 1
      %p75 = scmp.ne.s32.totalorder %s70, %s72
      %p76 = scmp.eq.s32.totalorder %s15, 0
      %p77 = por %p75, %p76
      %p78 = scmp.ne.s32.totalorder %s70, %s72
      %p79 = scmp.eq.s32.totalorder %s20, 1
      %p80 = por %p78, %p79
      %p81 = scmp.ne.s32.totalorder %s72, %s73
      %p82 = scmp.eq.s32.totalorder %s20, 0
      %p83 = por %p81, %p82
      %p84 = scmp.ne.s32.totalorder %s72, %s73
      %p85 = scmp.eq.s32.totalorder %s21, 1
      %p86 = por %p84, %p85
      %p88 = scmp.ne.s32.totalorder %s73, %s87
      %p89 = scmp.eq.s32.totalorder %s21, 0
      %p90 = por %p88, %p89
      %s91 = ssub.s32 %s15, %s22
      %p92 = scmp.eq.s32.totalorder %s91, 0
      %s94 = sadd.s32 %s93, 1
      %s95 = scalar_select %p92, %s93, %s94
      %p98 = pneg %p92
      %p99 = scmp.eq.s32.totalorder %s15, 1
      %p100 = por %p98, %p99
      %p101 = scmp.ne.s32.totalorder %s93, %s96
      %p102 = scmp.eq.s32.totalorder %s15, 0
      %p103 = por %p101, %p102
      %p104 = scmp.ne.s32.totalorder %s93, %s96
      %p105 = scmp.eq.s32.totalorder %s20, 1
      %p106 = por %p104, %p105
      %p107 = scmp.ne.s32.totalorder %s96, %s97
      %p108 = scmp.eq.s32.totalorder %s20, 0
      %p109 = por %p107, %p108
      %p110 = scmp.ne.s32.totalorder %s96, %s97
      %p111 = scmp.eq.s32.totalorder %s21, 1
      %p112 = por %p110, %p111
      %p114 = scmp.ne.s32.totalorder %s97, %s113
      %p115 = scmp.eq.s32.totalorder %s21, 0
      %p116 = por %p114, %p115
      %p117 = scmp.le.s32.totalorder 1, %s15
      %p118 = scmp.lt.s32.totalorder %s15, 3
      %p119 = pnand %p117, %p118
      %p120 = pneg %p119
      // Predicated region
      $region9: #{tpu_custom_call.1} parent=5 // pred_check
        _
      $region10: #{tpu_custom_call.1} parent=5 // pred_check_branch
        %122 = sbr.rel (%p119) target = $region12
      $region11: #{tpu_custom_call.1} parent=5 // pred_region
        %s123 = ssub.s32 %s15, 1
        // Predicated region
        $region13: #{tpu_custom_call.1} parent=11 // pred_check
          %p124 = pneg %p62
        $region14: #{tpu_custom_call.1} parent=11 // pred_check_branch
          %126 = sbr.rel (%p124) target = $region16
        $region15: #{tpu_custom_call.1} parent=11 // pred_region
          _
        $region16: #{tpu_custom_call.1} parent=11 // pred_fallthru
          _
        // Predicated region
        $region17: #{tpu_custom_call.1} parent=11 // pred_check
          %p127 = pneg %p83
        $region18: #{tpu_custom_call.1} parent=11 // pred_check_branch
          %129 = sbr.rel (%p127) target = $region20
        $region19: #{tpu_custom_call.1} parent=11 // pred_region
          _
        $region20: #{tpu_custom_call.1} parent=11 // pred_fallthru
          _
      $region12: #{tpu_custom_call.1} parent=5 // pred_fallthru
        _
      %p130 = scmp.lt.s32.totalorder %s15, 2
      // Predicated region
      $region21: #{tpu_custom_call.1} parent=5 // pred_check
        %p131 = pneg %p130
      $region22: #{tpu_custom_call.1} parent=5 // pred_check_branch
        %133 = sbr.rel (%p131) target = $region24
      $region23: #{tpu_custom_call.1} parent=5 // pred_region
        // Predicated region
        $region25: #{tpu_custom_call.1} parent=23 // pred_check
          %p134 = pneg %p35
        $region26: #{tpu_custom_call.1} parent=23 // pred_check_branch
          %136 = sbr.rel (%p134) target = $region28
        $region27: #{tpu_custom_call.1} parent=23 // pred_region
          %s137 = sand.u32 %s25, 1
          %s138 = scalar_lea.sflag [#allocation3], %s137
          %s139 = sand.u32 %s25, 1
          %s140 = smul.addr %s139, 16
          %s141 = scalar_lea.vmem [#allocation2], %s140
          %s142 = smul.u32 2, %s15
          %s143 = ssub.s32 3, %s142
          %p144 = scmp.lt.s32.totalorder %s143, 2
          %s145 = scalar_select %p144, %s143, 2
          %s146 = smul.u32 128, %s145
          %s148 = ssub.s32 256, %s146
          %149 = vsyncadd %s138, %s148
          %p150 = scmp.ne.s32.totalorder 0, %s146
          %s151 = smul.addr %s142, 128
          %s152 = scalar_lea.hbm %s0, %s151
          %s153 = smul.u32 8, %s145
          %s154 = sshll.u32 %s141, 4
          %s155 = int_to_ptr.vmem [resolvable:$true] %s154
          %s156 = sshll.u32 %s153, 4
          %160 = dma.hbm_to_vmem [thread:$0]  (%p150), %s152, %s156, %s155, %s138, 128, 128, 8
        $region28: #{tpu_custom_call.1} parent=23 // pred_fallthru
          _
      $region24: #{tpu_custom_call.1} parent=5 // pred_fallthru
        _
      %p161 = scmp.le.s32.totalorder 1, %s15
      %p162 = scmp.lt.s32.totalorder %s15, 3
      %p163 = pnand %p161, %p162
      %p164 = pneg %p163
      // Predicated region
      $region29: #{tpu_custom_call.1} parent=5 // pred_check
        _
      $region30: #{tpu_custom_call.1} parent=5 // pred_check_branch
        %166 = sbr.rel (%p163) target = $region32
      $region31: #{tpu_custom_call.1} parent=5 // pred_region
        %s167 = ssub.s32 %s15, 1
        %s168 = sand.u32 %s28, 1
        %s169 = scalar_lea.sflag [#allocation3], %s168
        %s170 = sand.u32 %s28, 1
        %s171 = smul.addr %s170, 16
        %s172 = scalar_lea.vmem [#allocation2], %s171
        // Predicated region
        $region33: #{tpu_custom_call.1} parent=31 // pred_check
          %p173 = pneg %p41
        $region34: #{tpu_custom_call.1} parent=31 // pred_check_branch
          %175 = sbr.rel (%p173) target = $region36
        $region35: #{tpu_custom_call.1} parent=31 // pred_region
          %176 = dma.done %s169, 256
        $region36: #{tpu_custom_call.1} parent=31 // pred_fallthru
          _
        %s177 = sand.u32 %s28, 1
        %s178 = scalar_lea.sflag [#allocation3], %s177
        %s179 = sand.u32 %s28, 1
        %s180 = smul.addr %s179, 16
        %s181 = scalar_lea.vmem [#allocation2], %s180
        %p182 = pneg %p41
        %p183 = pneg %p38
        %p184 = pneg %p62
        %p185 = pneg %p59
        %p186 = pneg %p83
        %p187 = pneg %p80
        %p188 = pneg %p109
        %p189 = pneg %p106
        %s190 = sand.u32 %s96, 1
        %s191 = scalar_lea.sflag [#allocation4], %s190
        %s192 = sand.u32 %s96, 1
        %s193 = smul.addr %s192, 16
        %s194 = scalar_lea.vmem [#allocation5], %s193
        %s195 = smul.u32 2, %s20
        %s196 = ssub.s32 3, %s195
        %p197 = scmp.lt.s32.totalorder %s196, 2
        %s198 = scalar_select %p197, %s196, 2
        %s199 = smul.u32 128, %s198
        %s200 = smul.u32 2, %s20
        %s201 = ssub.s32 3, %s200
        %p202 = scmp.lt.s32.totalorder %s201, 2
        %s203 = scalar_select %p202, %s201, 2
        %s204 = smul.u32 128, %s203
        %v205 = vld [vmem:[%s172] sm:$0xff]
        %v206 = vld [vmem:[%s172 + $0x8] sm:$0xff]
        %207 = vadd.xlane.f32.xlu0 %v205
        %v208 = vpop.xlane.xlu0 %207
        %209 = vadd.xlane.f32.xlu0 %v206
        %v210 = vpop.xlane.xlu0 %209
        %v211 = vrcp.pop 128.0
        %v212 = vmul.f32 %v208, %v211
        %v213 = vmul.f32 %v210, %v211
        %v214 = vsub.f32 %v205, %v212
        %v215 = vsub.f32 %v206, %v213
        %v216 = vmul.f32 %v214, %v214
        %v217 = vmul.f32 %v215, %v215
        %218 = vadd.xlane.f32.xlu0 %v216
        %v219 = vpop.xlane.xlu0 %218
        %220 = vadd.xlane.f32.xlu0 %v217
        %v221 = vpop.xlane.xlu0 %220
        %v222 = vmul.f32 %v219, %v211
        %v223 = vmul.f32 %v221, %v211
        %v224 = vadd.f32 %v222, 1e-05
        %v225 = vadd.f32 %v223, 1e-05
        %v226 = vrsqrt.pop %v224
        %v227 = vrsqrt.pop %v225
        %v228 = vmul.f32 %v214, %v226
        %v229 = vmul.f32 %v215, %v227
        %v230 = vld [vmem:[%s1] sm:$0x1]
        %v232 = vlaneseq
        %v233 = vshrl.u32 %v232, 7
        %v234 = vsub.s32 0, %v233
        %v235 = vrot.slane %v230, %v234
        %v237 = vmul.f32 %v228, %v235
        %v238 = vmul.f32 %v229, %v235
        %v239 = vld [vmem:[%s2] sm:$0x1]
        %v241 = vlaneseq
        %v242 = vshrl.u32 %v241, 7
        %v243 = vsub.s32 0, %v242
        %v244 = vrot.slane %v239, %v243
        %v246 = vadd.f32 %v237, %v244
        %v247 = vadd.f32 %v238, %v244
        %248 = vst [vmem:[%s194] sm:$0xff] %v246
        %249 = vst [vmem:[%s194 + $0x8] sm:$0xff] %v247
        %s250 = sand.u32 %s96, 1
        %s251 = scalar_lea.sflag [#allocation4], %s250
        %s252 = sand.u32 %s96, 1
        %s253 = smul.addr %s252, 16
        %s254 = scalar_lea.vmem [#allocation5], %s253
        // Predicated region
        $region37: #{tpu_custom_call.1} parent=31 // pred_check
          %p255 = pneg %p106
        $region38: #{tpu_custom_call.1} parent=31 // pred_check_branch
          %257 = sbr.rel (%p255) target = $region40
        $region39: #{tpu_custom_call.1} parent=31 // pred_region
          %s258 = smul.u32 2, %s20
          %s259 = ssub.s32 3, %s258
          %p260 = scmp.lt.s32.totalorder %s259, 2
          %s261 = scalar_select %p260, %s259, 2
          %s262 = smul.u32 128, %s261
          %s264 = ssub.s32 256, %s262
          %265 = vsyncadd %s251, %s264
          %p266 = scmp.ne.s32.totalorder 0, %s262
          %s267 = smul.addr %s258, 128
          %s268 = scalar_lea.hbm %s3, %s267
          %s269 = smul.u32 8, %s261
          %s270 = sshll.u32 %s254, 4
          %s271 = int_to_ptr.vmem [resolvable:$true] %s270
          %s272 = sshll.u32 %s269, 4
          %276 = dma.vmem_to_hbm [thread:$0]  (%p266), %s271, %s272, %s268, %s251, 128, 128, 8
        $region40: #{tpu_custom_call.1} parent=31 // pred_fallthru
          _
      $region32: #{tpu_custom_call.1} parent=5 // pred_fallthru
        _
      %p277 = scmp.le.s32.totalorder 2, %s15
      // Predicated region
      $region41: #{tpu_custom_call.1} parent=5 // pred_check
        %p278 = pneg %p277
      $region42: #{tpu_custom_call.1} parent=5 // pred_check_branch
        %280 = sbr.rel (%p278) target = $region44
      $region43: #{tpu_custom_call.1} parent=5 // pred_region
        %s281 = ssub.s32 %s15, 2
        // Predicated region
        $region45: #{tpu_custom_call.1} parent=43 // pred_check
          %p282 = pneg %p112
        $region46: #{tpu_custom_call.1} parent=43 // pred_check_branch
          %284 = sbr.rel (%p282) target = $region48
        $region47: #{tpu_custom_call.1} parent=43 // pred_region
          %s285 = sand.u32 %s97, 1
          %s286 = scalar_lea.sflag [#allocation4], %s285
          %s287 = sand.u32 %s97, 1
          %s288 = smul.addr %s287, 16
          %s289 = scalar_lea.vmem [#allocation5], %s288
          %290 = dma.done %s286, 256
        $region48: #{tpu_custom_call.1} parent=43 // pred_fallthru
          _
      $region44: #{tpu_custom_call.1} parent=5 // pred_fallthru
        _
    $region6: #{tpu_custom_call.1} parent=1 // loop_footer
      %s19 = sadd.s32 1, %s15
    $region7: #{tpu_custom_call.1} parent=1 // loop_footer_branch
      %14 = sbr.rel target = $region3
    $region8: #{tpu_custom_call.1} parent=1 // loop_exit
      _
    %291 = vsyncpa [#allocation3], 1
    %s292 = scalar_lea.sflag [#allocation3], 1
    %293 = vsyncpa %s292, 1
    %294 = vsyncpa [#allocation4], 1
    %s295 = scalar_lea.sflag [#allocation4], 1
    %296 = vsyncpa %s295, 1

</llo_original>
